<compile_context>
chip_gen: v5e
topology: v5e:2x2
jax: 0.10.0
libtpu: 0.0.40
codegen_flags: <defaults>
</compile_context>

<pallas_src>
import math
import functools

import jax
import jax.numpy as jnp
from jax.experimental import pallas as pl
from jax.experimental.pallas import tpu as pltpu


def make_pos_embedding(L, D, dtype=jnp.float32):
    """Deterministic parameter setup, mirrors PositionalEncoding.__init__."""
    den = jnp.exp(-jnp.arange(0, D, 2, dtype=jnp.float32) * math.log(10000.0) / D)
    pos = jnp.arange(0, L, dtype=jnp.float32).reshape(L, 1)
    pe = jnp.zeros((L, D), dtype=jnp.float32)
    pe = pe.at[:, 0::2].set(jnp.sin(pos * den))
    pe = pe.at[:, 1::2].set(jnp.cos(pos * den))
    return pe[:, None, :].astype(dtype)  # (L, 1, D)


def _pe_add_kernel(x_ref, pe_ref, o_ref, *, batch):
    # x_ref: (tS, B*D), pe_ref: (tS, D) -> broadcast the positional row over batch.
    pe_b = jnp.tile(pe_ref[...], (1, batch))              # (tS, B*D), pe_b[:, b*D+d] = pe[:, d]
    o_ref[...] = (x_ref[...] + pe_b).astype(o_ref.dtype)


def _pe_add_dropout_kernel(x_ref, pe_ref, bits_ref, o_ref, *, batch, threshold, scale):
    pe_b = jnp.tile(pe_ref[...], (1, batch))
    y = x_ref[...] + pe_b
    keep = bits_ref[...] >= jnp.uint32(threshold)          # P(keep) = 1 - dropout_rate
    o_ref[...] = jnp.where(keep, y * scale, 0.0).astype(o_ref.dtype)


def _choose_tile_s(S, row_bytes, max_block_bytes):
    """Largest multiple-of-8 sequence tile whose x-block stays under max_block_bytes."""
    t = max(1, max_block_bytes // max(row_bytes, 1))
    if t >= S:
        return S
    t = max(8, (t // 8) * 8)     # keep the sublane dim a multiple of 8
    return S if t >= S else t


def positional_encoding(x, pos_embedding, *, dropout_rate=0.1, dropout_key=None,
                        max_block_bytes=2 * 1024 * 1024):
    """x: (S, B, D) seq-first embeddings; pos_embedding: (L, 1, D) with L >= S.

    Returns dropout(x + pos_embedding[:S]) — matches the PyTorch module forward.
    Note: the dropout mask is drawn from `dropout_key` in the wrapper, so it is
    reproducible for a fixed key but independent of the tiling.
    """
    S, B, D = x.shape
    BD = B * D
    pe = pos_embedding[:S, 0, :].astype(x.dtype)           # (S, D)
    x2 = x.reshape(S, BD)                                   # lane-dense layout

    row_bytes = BD * x.dtype.itemsize
    tile_s = _choose_tile_s(S, row_bytes, max_block_bytes)
    grid = (pl.cdiv(S, tile_s),)

    x_spec = pl.BlockSpec((tile_s, BD), lambda i: (i, 0))
    pe_spec = pl.BlockSpec((tile_s, D), lambda i: (i, 0))
    out_spec = pl.BlockSpec((tile_s, BD), lambda i: (i, 0))

    compiler_params = pltpu.CompilerParams(
        dimension_semantics=("parallel",),                  # tiles independent -> megacore on v7x
        vmem_limit_bytes=32 * 1024 * 1024,                  # fits v5e/v6e/v7x scoped VMEM
    )

    if dropout_rate > 0.0:
        if dropout_key is None:
            dropout_key = jax.random.PRNGKey(0)
        # TODO(synk): on real TPU, pltpu.prng_seed/prng_random_bits would draw the mask
        # in-kernel and avoid streaming this bits tensor from HBM; generated host-side here
        # because those primitives do not lower in CPU interpret mode.
        bits = jax.random.bits(dropout_key, (S, BD), dtype=jnp.uint32)
        threshold = min(int(round(dropout_rate * 2.0 ** 32)), 2 ** 32 - 1)
        scale = 1.0 / (1.0 - dropout_rate)
        kernel = functools.partial(_pe_add_dropout_kernel, batch=B,
                                   threshold=threshold, scale=scale)
        out2 = pl.pallas_call(
            kernel,
            out_shape=jax.ShapeDtypeStruct((S, BD), x.dtype),
            grid=grid,
            in_specs=[x_spec, pe_spec, pl.BlockSpec((tile_s, BD), lambda i: (i, 0))],
            out_specs=out_spec,
            compiler_params=compiler_params,
        )(x2, pe, bits)
    else:
        kernel = functools.partial(_pe_add_kernel, batch=B)
        out2 = pl.pallas_call(
            kernel,
            out_shape=jax.ShapeDtypeStruct((S, BD), x.dtype),
            grid=grid,
            in_specs=[x_spec, pe_spec],
            out_specs=out_spec,
            compiler_params=compiler_params,
        )(x2, pe)

    return out2.reshape(S, B, D)


if __name__ == "__main__":
    # Small shapes consistent with the module: seq=8, batch=2, hidden D=32, table L=16.
    S, B, D, L = 8, 2, 32, 16
    dropout_rate = 0.1

    root = jax.random.PRNGKey(0)
    kx, kd = jax.random.split(root)
    x = jax.random.normal(kx, (S, B, D), dtype=jnp.float32)
    pos_embedding = make_pos_embedding(L, D)

    # Training-mode forward (fused add + dropout).
    out = positional_encoding(x, pos_embedding, dropout_rate=dropout_rate, dropout_key=kd)
    out = jax.block_until_ready(out)
    assert out.shape == (S, B, D)

    # Every element must be either dropped (exactly 0) or a scaled survivor of (x + pe).
    ref = x + pos_embedding[:S]
    scaled = ref / (1.0 - dropout_rate)
    ok = jnp.all(jnp.isclose(out, 0.0, atol=1e-6) |
                 jnp.isclose(out, scaled, atol=1e-5, rtol=1e-5))
    assert bool(ok)

    # Eval-mode forward (dropout disabled) must match the pure-JAX reference.
    out_eval = jax.block_until_ready(positional_encoding(x, pos_embedding, dropout_rate=0.0))
    assert jnp.allclose(out_eval, ref, atol=1e-6)

    # Exercise a multi-step grid with a non-divisible sequence length (pl.cdiv boundary).
    S2 = 20
    x_big = jax.random.normal(jax.random.PRNGKey(1), (S2, B, D), dtype=jnp.float32)
    pe_big = make_pos_embedding(64, D)
    out_big = jax.block_until_ready(
        positional_encoding(x_big, pe_big, dropout_rate=0.0,
                            max_block_bytes=8 * B * D * 4)   # forces tile_s=8, grid=(3,)
    )
    assert jnp.allclose(out_big, x_big + pe_big[:S2], atol=1e-6)

    print("KERNEL_OK")
</pallas_src>

<mosaic_0001>
module attributes {stable_mosaic.version = 11 : i64} {
  func.func @_pe_add_dropout_kernel(%arg0: i32, %arg1: memref<8x64xf32, #tpu.memory_space<vmem>>, %arg2: memref<8x32xf32, #tpu.memory_space<vmem>>, %arg3: memref<8x64xi32, #tpu.memory_space<vmem>>, %arg4: memref<8x64xf32, #tpu.memory_space<vmem>>) attributes {dimension_semantics = [#tpu.dimension_semantics<parallel>], iteration_bounds = array<i64: 1>, scalar_prefetch = 0 : i64, scratch_operands = 0 : i64, tpu.core_type = #tpu.core_type<tc>, window_params = [{transform_indices = @transform_0, window_bounds = array<i64: 8, 64>}, {transform_indices = @transform_1, window_bounds = array<i64: 8, 32>}, {transform_indices = @transform_2, window_bounds = array<i64: 8, 64>}, {transform_indices = @transform_3, window_bounds = array<i64: 8, 64>}]} {
    %c0 = arith.constant 0 : index
    %c0_0 = arith.constant 0 : index
    %0 = vector.load %arg2[%c0, %c0_0] : memref<8x32xf32, #tpu.memory_space<vmem>>, vector<8x32xf32>
    %1 = tpu.concatenate %0, %0 in 1 : vector<8x32xf32>, vector<8x32xf32> -> vector<8x64xf32>
    %c0_1 = arith.constant 0 : index
    %c0_2 = arith.constant 0 : index
    %2 = vector.load %arg1[%c0_1, %c0_2] : memref<8x64xf32, #tpu.memory_space<vmem>>, vector<8x64xf32>
    %3 = arith.addf %2, %1 : vector<8x64xf32>
    %c0_3 = arith.constant 0 : index
    %c0_4 = arith.constant 0 : index
    %4 = vector.load %arg3[%c0_3, %c0_4] : memref<8x64xi32, #tpu.memory_space<vmem>>, vector<8x64xi32>
    %c429496730_i32 = arith.constant 429496730 : i32
    %5 = vector.broadcast %c429496730_i32 : i32 to vector<8x64xi32>
    %6 = arith.cmpi uge, %4, %5 : vector<8x64xi32>
    %cst = arith.constant 1.11111116 : f32
    %7 = vector.broadcast %cst : f32 to vector<8x64xf32>
    %8 = arith.mulf %3, %7 : vector<8x64xf32>
    %cst_5 = arith.constant 0.000000e+00 : f32
    %9 = vector.broadcast %cst_5 : f32 to vector<8x64xf32>
    %10 = arith.select %6, %8, %9 : vector<8x64xi1>, vector<8x64xf32>
    %c0_6 = arith.constant 0 : index
    %c0_7 = arith.constant 0 : index
    %11 = vector.load %arg4[%c0_6, %c0_7] : memref<8x64xf32, #tpu.memory_space<vmem>>, vector<8x64xf32>
    tpu.vector_store %arg4[%c0_6, %c0_7], %10 {strides = array<i32>} : memref<8x64xf32, #tpu.memory_space<vmem>>, vector<8x64xf32>,
    return
  }
  func.func @transform_0(%arg0: i32) -> (i32, i32) {
    %c0_i32 = arith.constant 0 : i32
    %c0_i32_0 = arith.constant 0 : i32
    return %arg0, %c0_i32 : i32, i32
  }
  func.func @transform_1(%arg0: i32) -> (i32, i32) {
    %c0_i32 = arith.constant 0 : i32
    %c0_i32_0 = arith.constant 0 : i32
    return %arg0, %c0_i32 : i32, i32
  }
  func.func @transform_2(%arg0: i32) -> (i32, i32) {
    %c0_i32 = arith.constant 0 : i32
    %c0_i32_0 = arith.constant 0 : i32
    return %arg0, %c0_i32 : i32, i32
  }
  func.func @transform_3(%arg0: i32) -> (i32, i32) {
    %c0_i32 = arith.constant 0 : i32
    %c0_i32_0 = arith.constant 0 : i32
    return %arg0, %c0_i32 : i32, i32
  }
}

</mosaic_0001>

<llo_original>
// kernel: tpu_custom_call.1
$region0: #{tpu_custom_call.1}
  #allocation0 [shape = 'u32[]', space=smem, size = 0x4, offset = 0x4, fixed_abs, tag = 'smem constant byte address 0x4 - core index']
  #allocation1 [shape = 'u32[72,128]{1,0:T(1,128)}', space=vmem, size = 0x9000, scoped, tag = 'internal scratch']
  %s0 = inlined_call_operand.hbm [shape: f32[8,64], index: 0, kind: input, shape index: {}]
  %s1 = inlined_call_operand.hbm [shape: f32[8,32], index: 1, kind: input, shape index: {}]
  %s2 = inlined_call_operand.hbm [shape: u32[8,64], index: 2, kind: input, shape index: {}]
  %s3 = inlined_call_operand.hbm [shape: f32[8,64], index: 3, kind: output, shape index: {}]
  %s4 = sld [smem:[#allocation0]]
  $region34: #{tpu_custom_call.1} parent=0
    _
  %s6 = ssub.s32 1, %s4
  %s7 = scalar_select 0, %s6, %s4
  $region1: #{tpu_custom_call.1} parent=0
    #allocation2 [shape = 'u8[4096]{0}', space=vmem, size = 0x1000, scoped, tag = 'input window, operand 0, single buffered']
    #allocation3 [shape = 's32[1]{0}', space=sflag, size = 0x4, scoped, tag = 'scoped memory for tpu_custom_call.1']
    #allocation4 [shape = 's32[1]{0}', space=sflag, size = 0x4, scoped, tag = 'scoped memory for tpu_custom_call.1']
    #allocation5 [shape = 'u8[4096]{0}', space=vmem, size = 0x1000, scoped, tag = 'input window, operand 1, single buffered']
    #allocation6 [shape = 's32[1]{0}', space=sflag, size = 0x4, scoped, tag = 'scoped memory for tpu_custom_call.1']
    #allocation7 [shape = 'u8[4096]{0}', space=vmem, size = 0x1000, scoped, tag = 'input window, operand 2, single buffered']
    #allocation8 [shape = 'u8[4096]{0}', space=vmem, size = 0x1000, scoped, tag = 'output window, operand 0, single buffered']
    %8 = vsyncpa [#allocation3], 0
    %9 = vsyncpa [#allocation6], 0
    %10 = vsyncpa [#allocation4], 0
    // Predicated region
    $region2: #{tpu_custom_call.1} parent=1 // pred_check
      _
    $region3: #{tpu_custom_call.1} parent=1 // pred_check_branch
      %12 = sbr.rel (0) target = $region5
    $region4: #{tpu_custom_call.1} parent=1 // pred_region
      %14 = vsyncadd [#allocation3], 0
      %s16 = sshll.u32 %s0, 4
      %s17 = int_to_ptr.hbm [resolvable:$true] %s16
      %s18 = sshll.u32 [#allocation2], 4
      %s19 = int_to_ptr.vmem [resolvable:$true] %s18
      %21 = dma.hbm_to_vmem [thread:$0]  %s17, 128, %s19, [#allocation3]
    $region5: #{tpu_custom_call.1} parent=1 // pred_fallthru
      _
    // Predicated region
    $region6: #{tpu_custom_call.1} parent=1 // pred_check
      _
    $region7: #{tpu_custom_call.1} parent=1 // pred_check_branch
      %23 = sbr.rel (0) target = $region9
    $region8: #{tpu_custom_call.1} parent=1 // pred_region
      %25 = vsyncadd [#allocation6], 0
      %s27 = sshll.u32 %s1, 4
      %s28 = int_to_ptr.hbm [resolvable:$true] %s27
      %s29 = sshll.u32 [#allocation5], 4
      %s30 = int_to_ptr.vmem [resolvable:$true] %s29
      %32 = dma.hbm_to_vmem [thread:$0]  %s28, 128, %s30, [#allocation6]
    $region9: #{tpu_custom_call.1} parent=1 // pred_fallthru
      _
    // Predicated region
    $region10: #{tpu_custom_call.1} parent=1 // pred_check
      _
    $region11: #{tpu_custom_call.1} parent=1 // pred_check_branch
      %34 = sbr.rel (0) target = $region13
    $region12: #{tpu_custom_call.1} parent=1 // pred_region
      %36 = vsyncadd [#allocation6], 0
      %s38 = sshll.u32 %s2, 4
      %s39 = int_to_ptr.hbm [resolvable:$true] %s38
      %s40 = sshll.u32 [#allocation7], 4
      %s41 = int_to_ptr.vmem [resolvable:$true] %s40
      %43 = dma.hbm_to_vmem [thread:$0]  %s39, 128, %s41, [#allocation6]
    $region13: #{tpu_custom_call.1} parent=1 // pred_fallthru
      _
    // Predicated region
    $region14: #{tpu_custom_call.1} parent=1 // pred_check
      _
    $region15: #{tpu_custom_call.1} parent=1 // pred_check_branch
      %45 = sbr.rel (0) target = $region17
    $region16: #{tpu_custom_call.1} parent=1 // pred_region
      %47 = dma.done [#allocation3], 128
    $region17: #{tpu_custom_call.1} parent=1 // pred_fallthru
      _
    // Predicated region
    $region18: #{tpu_custom_call.1} parent=1 // pred_check
      _
    $region19: #{tpu_custom_call.1} parent=1 // pred_check_branch
      %49 = sbr.rel (0) target = $region21
    $region20: #{tpu_custom_call.1} parent=1 // pred_region
      %51 = dma.done [#allocation6], 128
    $region21: #{tpu_custom_call.1} parent=1 // pred_fallthru
      _
    // Predicated region
    $region22: #{tpu_custom_call.1} parent=1 // pred_check
      _
    $region23: #{tpu_custom_call.1} parent=1 // pred_check_branch
      %53 = sbr.rel (0) target = $region25
    $region24: #{tpu_custom_call.1} parent=1 // pred_region
      %55 = dma.done [#allocation6], 128
    $region25: #{tpu_custom_call.1} parent=1 // pred_fallthru
      _
    %v56 = vld [vmem:[#allocation5] sm:$0xff]
    %58 = vrot.lane.b32.xlu0 %v56, 32
    %v59 = vpop.permute.xlu0 %58
    %vm61 = vcmask 261120
    %v62 = vsel %vm61, %v56, %v59
    %v63 = vld [vmem:[#allocation2] sm:$0xff]
    %v64 = vadd.f32 %v63, %v62
    %v65 = vld [vmem:[#allocation7] sm:$0xff]
    %v66 = vadd.s32 %v65, 2147483648
    %vm68 = vcmp.ge.s32.totalorder %v66, 2576980378
    %v69 = vmul.f32 %v64, 1.1111112
    %v70 = vsel %vm68, %v69, 0.0
    %vm71 = vcmask 523264
    %72 = vst.msk [vmem:[#allocation8] sm:$0xff] %vm71, %v70
    // Predicated region
    $region26: #{tpu_custom_call.1} parent=1 // pred_check
      _
    $region27: #{tpu_custom_call.1} parent=1 // pred_check_branch
      %74 = sbr.rel (0) target = $region29
    $region28: #{tpu_custom_call.1} parent=1 // pred_region
      %76 = vsyncadd [#allocation4], 0
      %s78 = sshll.u32 [#allocation8], 4
      %s79 = int_to_ptr.vmem [resolvable:$true] %s78
      %s80 = sshll.u32 %s3, 4
      %s81 = int_to_ptr.hbm [resolvable:$true] %s80
      %83 = dma.vmem_to_hbm [thread:$0]  %s79, 128, %s81, [#allocation4]
    $region29: #{tpu_custom_call.1} parent=1 // pred_fallthru
      _
    // Predicated region
    $region30: #{tpu_custom_call.1} parent=1 // pred_check
      _
    $region31: #{tpu_custom_call.1} parent=1 // pred_check_branch
      %85 = sbr.rel (0) target = $region33
    $region32: #{tpu_custom_call.1} parent=1 // pred_region
      %87 = dma.done [#allocation4], 128
    $region33: #{tpu_custom_call.1} parent=1 // pred_fallthru
      _
    %88 = vsyncpa [#allocation3], 1
    %89 = vsyncpa [#allocation6], 1
    %90 = vsyncpa [#allocation4], 1

</llo_original>
